<compile_context>
chip_gen: v6e
topology: v6e:2x2x1
jax: 0.10.0
libtpu: 0.0.40
codegen_flags: <defaults>
</compile_context>

<pallas_src>
import functools

import jax
import jax.numpy as jnp
from jax.experimental import pallas as pl
from jax.experimental.pallas import tpu as pltpu


def _resblock_kernel(cfg, x_ref, w1_ref, b1_ref, w2_ref, b2_ref,
                     w3_ref, b3_ref, o_ref):
    (cin, cout, K, K2, dil, L, L2, lpad2, p_left, lpad3, use_identity) = cfg

    xp = x_ref[0]                                        # (Cin, Lp) f32, pre-padded

    # ---- conv1 + bias, evaluated on an extended range of length L2 so that
    #      conv2's halo is available without an in-kernel concat ------------
    acc1 = jnp.broadcast_to(b1_ref[...], (cout, L2))     # bias init (hoisted)
    for t in range(K):                                   # static unroll over taps
        base = t * dil
        for ci in range(cin):
            w_col = w1_ref[:, t * cin + ci: t * cin + ci + 1]   # (Cout, 1)
            x_row = xp[ci:ci + 1, base:base + L2]               # (1, L2)
            acc1 = acc1 + w_col * x_row                         # VPU FMA, (Cout, L2)

    # relu, then zero the columns outside [0, L): conv2 must see PyTorch's
    # zero padding of relu(conv1(x)), not conv1 evaluated out of range.
    pos = jax.lax.broadcasted_iota(jnp.int32, (1, L2), 1)
    valid = jnp.logical_and(pos >= lpad2, pos < lpad2 + L)
    r = jnp.where(valid, jnp.maximum(acc1, 0.0), 0.0)    # (Cout, L2)

    # ---- conv2 (Cout -> 1): per-tap FMA then one sublane reduction --------
    acc2 = jnp.zeros((cout, L), jnp.float32)
    for t in range(K2):
        w_col = w2_ref[:, t:t + 1]                       # (Cout, 1)
        acc2 = acc2 + w_col * r[:, t * dil: t * dil + L]
    y2 = jnp.sum(acc2, axis=0, keepdims=True) + b2_ref[0]   # (1, L), b2 from SMEM

    # ---- shortcut ----------------------------------------------------------
    if use_identity:                                     # Cin == Cout
        shortcut = xp[:, p_left: p_left + L]             # (Cin, L)
    else:                                                # conv3, dilation 1
        acc3 = jnp.broadcast_to(b3_ref[...], (cout, L))
        for t in range(K):
            base = p_left - lpad3 + t
            for ci in range(cin):
                w_col = w3_ref[:, t * cin + ci: t * cin + ci + 1]
                x_row = xp[ci:ci + 1, base:base + L]
                acc3 = acc3 + w_col * x_row
        shortcut = acc3                                  # (Cout, L)

    # residual add (y2 broadcasts over channels) + final relu, lane-dense store
    o_ref[0] = jnp.maximum(y2 + shortcut, 0.0)


def resblock_forward(x_ncl, w1, b1, w2, b2, w3, b3, *, dilation):
    """x_ncl: (B, Cin, L).  Weights in PyTorch Conv1d layout (Cout, Cin, K)."""
    B, cin, L = x_ncl.shape
    cout, _, K = w1.shape
    K2 = w2.shape[2]                                     # 3 in the module
    use_identity = (cin == cout)
    out_c = cin if use_identity else cout

    total1 = dilation * (K - 1)
    lpad1, rpad1 = total1 // 2, total1 - total1 // 2
    total2 = dilation * (K2 - 1)
    lpad2, rpad2 = total2 // 2, total2 - total2 // 2
    lpad3 = (K - 1) // 2                                 # conv3 has dilation 1
    p_left, p_right = lpad1 + lpad2, rpad1 + rpad2
    L2 = L + lpad2 + rpad2
    Lp = L + p_left + p_right

    f32 = jnp.float32
    # Single zero-pad along L in HBM; kernel consumes NCL directly.
    xp = jnp.pad(x_ncl.astype(f32), ((0, 0), (0, 0), (p_left, p_right)))

    # Weights as (Cout, K*Cin): a (Cout,1) column per (tap, cin) is a cheap
    # static lane slice.  Per-channel biases as (Cout,1) sublane columns.
    w1m = jnp.transpose(w1, (0, 2, 1)).reshape(cout, K * cin).astype(f32)
    w3m = jnp.transpose(w3, (0, 2, 1)).reshape(cout, K * cin).astype(f32)
    w2m = w2[0].astype(f32)                              # (Cout, K2)
    b1c = b1.reshape(cout, 1).astype(f32)
    b3c = b3.reshape(cout, 1).astype(f32)
    b2s = b2.reshape(1).astype(f32)                      # scalar -> SMEM

    cfg = (cin, cout, K, K2, dilation, L, L2, lpad2, p_left, lpad3,
           use_identity)
    kernel = functools.partial(_resblock_kernel, cfg)

    out = pl.pallas_call(
        kernel,
        out_shape=jax.ShapeDtypeStruct((B, out_c, L), f32),
        grid=(B,),
        in_specs=[
            pl.BlockSpec((1, cin, Lp), lambda b: (b, 0, 0)),
            pl.BlockSpec(w1m.shape, lambda b: (0, 0)),
            pl.BlockSpec(b1c.shape, lambda b: (0, 0)),
            pl.BlockSpec(w2m.shape, lambda b: (0, 0)),
            pl.BlockSpec(memory_space=pltpu.MemorySpace.SMEM),   # scalar b2
            pl.BlockSpec(w3m.shape, lambda b: (0, 0)),
            pl.BlockSpec(b3c.shape, lambda b: (0, 0)),
        ],
        out_specs=pl.BlockSpec((1, out_c, L), lambda b: (b, 0, 0)),
        compiler_params=pltpu.CompilerParams(
            dimension_semantics=("parallel",),
            vmem_limit_bytes=32 * 1024 * 1024),
    )(xp, w1m, b1c, w2m, b2s, w3m, b3c)

    return out                                           # already (B, C, L)


def _ref_forward(x, w1, b1, w2, b2, w3, b3, dilation):
    """Plain-JAX reference matching PyTorch Conv1d(padding='same')."""
    def conv(x, w, b, d):
        k = w.shape[2]
        total = d * (k - 1)
        pad = (total // 2, total - total // 2)
        y = jax.lax.conv_general_dilated(
            x, w, window_strides=(1,), padding=[pad], rhs_dilation=(d,),
            dimension_numbers=('NCH', 'OIH', 'NCH'))
        return y + b[None, :, None]

    r = jax.nn.relu(conv(x, w1, b1, dilation))
    r = conv(r, w2, b2, dilation)
    shortcut = x if x.shape[1] == w1.shape[0] else conv(x, w3, b3, 1)
    return jax.nn.relu(r + shortcut)


if __name__ == "__main__":
    # ResBlock(in_channels=4, out_channels=8, kernel_size=3, dilation_rate=2)
    B, CIN, COUT, K, L, DIL = 2, 4, 8, 3, 16, 2

    key = jax.random.PRNGKey(0)
    ks = jax.random.split(key, 7)
    w1 = 0.1 * jax.random.normal(ks[0], (COUT, CIN, K), jnp.float32)
    b1 = 0.1 * jax.random.normal(ks[1], (COUT,), jnp.float32)
    w2 = 0.1 * jax.random.normal(ks[2], (1, COUT, 3), jnp.float32)
    b2 = 0.1 * jax.random.normal(ks[3], (1,), jnp.float32)
    w3 = 0.1 * jax.random.normal(ks[4], (COUT, CIN, K), jnp.float32)
    b3 = 0.1 * jax.random.normal(ks[5], (COUT,), jnp.float32)
    x = jax.random.normal(ks[6], (B, CIN, L), jnp.float32)

    # conv3-shortcut path (in_channels != out_channels)
    out = jax.block_until_ready(
        resblock_forward(x, w1, b1, w2, b2, w3, b3, dilation=DIL))
    ref = _ref_forward(x, w1, b1, w2, b2, w3, b3, DIL)
    assert out.shape == ref.shape == (B, COUT, L)
    assert jnp.allclose(out, ref, atol=1e-4, rtol=1e-4)

    # identity-shortcut path (in_channels == out_channels)
    w1i = 0.1 * jax.random.normal(ks[0], (CIN, CIN, K), jnp.float32)
    b1i = 0.1 * jax.random.normal(ks[1], (CIN,), jnp.float32)
    w2i = 0.1 * jax.random.normal(ks[2], (1, CIN, 3), jnp.float32)
    w3i = 0.1 * jax.random.normal(ks[4], (CIN, CIN, K), jnp.float32)
    b3i = 0.1 * jax.random.normal(ks[5], (CIN,), jnp.float32)
    out_i = jax.block_until_ready(
        resblock_forward(x, w1i, b1i, w2i, b2, w3i, b3i, dilation=DIL))
    ref_i = _ref_forward(x, w1i, b1i, w2i, b2, w3i, b3i, DIL)
    assert out_i.shape == ref_i.shape == (B, CIN, L)
    assert jnp.allclose(out_i, ref_i, atol=1e-4, rtol=1e-4)

    print("KERNEL_OK")
</pallas_src>

<mosaic_0001>
module attributes {stable_mosaic.version = 11 : i64} {
  func.func @_resblock_kernel(%arg0: i32, %arg1: memref<1x4x24xf32, #tpu.memory_space<vmem>>, %arg2: memref<8x12xf32, #tpu.memory_space<vmem>>, %arg3: memref<8x1xf32, #tpu.memory_space<vmem>>, %arg4: memref<8x3xf32, #tpu.memory_space<vmem>>, %arg5: memref<1xf32, #tpu.memory_space<smem>>, %arg6: memref<8x12xf32, #tpu.memory_space<vmem>>, %arg7: memref<8x1xf32, #tpu.memory_space<vmem>>, %arg8: memref<1x8x16xf32, #tpu.memory_space<vmem>>) attributes {dimension_semantics = [#tpu.dimension_semantics<parallel>], iteration_bounds = array<i64: 2>, scalar_prefetch = 0 : i64, scratch_operands = 0 : i64, tpu.core_type = #tpu.core_type<tc>, window_params = [{transform_indices = @transform_0, window_bounds = array<i64: 1, 4, 24>}, {pipeline_mode = #tpu.pipeline_mode<synchronous>, transform_indices = @transform_1, window_bounds = array<i64: 8, 12>}, {pipeline_mode = #tpu.pipeline_mode<synchronous>, transform_indices = @transform_2, window_bounds = array<i64: 8, 1>}, {pipeline_mode = #tpu.pipeline_mode<synchronous>, transform_indices = @transform_3, window_bounds = array<i64: 8, 3>}, {transform_indices = @transform_4, window_bounds = array<i64: 1>}, {pipeline_mode = #tpu.pipeline_mode<synchronous>, transform_indices = @transform_5, window_bounds = array<i64: 8, 12>}, {pipeline_mode = #tpu.pipeline_mode<synchronous>, transform_indices = @transform_6, window_bounds = array<i64: 8, 1>}, {transform_indices = @transform_7, window_bounds = array<i64: 1, 8, 16>}]} {
    %c0 = arith.constant 0 : index
    %c0_0 = arith.constant 0 : index
    %c0_1 = arith.constant 0 : index
    %0 = vector.load %arg1[%c0, %c0_0, %c0_1] : memref<1x4x24xf32, #tpu.memory_space<vmem>>, vector<1x4x24xf32>
    %1 = vector.shape_cast %0 : vector<1x4x24xf32> to vector<4x24xf32>
    %c0_2 = arith.constant 0 : index
    %c0_3 = arith.constant 0 : index
    %2 = vector.load %arg3[%c0_2, %c0_3] : memref<8x1xf32, #tpu.memory_space<vmem>>, vector<8x1xf32>
    %3 = vector.shape_cast %2 : vector<8x1xf32> to vector<8x1xf32>
    %4 = vector.broadcast %3 : vector<8x1xf32> to vector<8x20xf32>
    %c0_4 = arith.constant 0 : index
    %c0_5 = arith.constant 0 : index
    %5 = vector.load %arg2[%c0_4, %c0_5] : memref<8x12xf32, #tpu.memory_space<vmem>>, vector<8x1xf32>
    %6 = vector.extract_strided_slice %1 {offsets = [0, 0], sizes = [1, 20], strides = [1, 1]} : vector<4x24xf32> to vector<1x20xf32>
    %7 = vector.broadcast %5 : vector<8x1xf32> to vector<8x20xf32>
    %8 = vector.broadcast %6 : vector<1x20xf32> to vector<8x20xf32>
    %9 = arith.mulf %7, %8 : vector<8x20xf32>
    %10 = arith.addf %4, %9 : vector<8x20xf32>
    %c0_6 = arith.constant 0 : index
    %c1 = arith.constant 1 : index
    %11 = vector.load %arg2[%c0_6, %c1] : memref<8x12xf32, #tpu.memory_space<vmem>>, vector<8x1xf32>
    %12 = vector.extract_strided_slice %1 {offsets = [1, 0], sizes = [1, 20], strides = [1, 1]} : vector<4x24xf32> to vector<1x20xf32>
    %13 = vector.broadcast %11 : vector<8x1xf32> to vector<8x20xf32>
    %14 = vector.broadcast %12 : vector<1x20xf32> to vector<8x20xf32>
    %15 = arith.mulf %13, %14 : vector<8x20xf32>
    %16 = arith.addf %10, %15 : vector<8x20xf32>
    %c0_7 = arith.constant 0 : index
    %c2 = arith.constant 2 : index
    %17 = vector.load %arg2[%c0_7, %c2] : memref<8x12xf32, #tpu.memory_space<vmem>>, vector<8x1xf32>
    %18 = vector.extract_strided_slice %1 {offsets = [2, 0], sizes = [1, 20], strides = [1, 1]} : vector<4x24xf32> to vector<1x20xf32>
    %19 = vector.broadcast %17 : vector<8x1xf32> to vector<8x20xf32>
    %20 = vector.broadcast %18 : vector<1x20xf32> to vector<8x20xf32>
    %21 = arith.mulf %19, %20 : vector<8x20xf32>
    %22 = arith.addf %16, %21 : vector<8x20xf32>
    %c0_8 = arith.constant 0 : index
    %c3 = arith.constant 3 : index
    %23 = vector.load %arg2[%c0_8, %c3] : memref<8x12xf32, #tpu.memory_space<vmem>>, vector<8x1xf32>
    %24 = vector.extract_strided_slice %1 {offsets = [3, 0], sizes = [1, 20], strides = [1, 1]} : vector<4x24xf32> to vector<1x20xf32>
    %25 = vector.broadcast %23 : vector<8x1xf32> to vector<8x20xf32>
    %26 = vector.broadcast %24 : vector<1x20xf32> to vector<8x20xf32>
    %27 = arith.mulf %25, %26 : vector<8x20xf32>
    %28 = arith.addf %22, %27 : vector<8x20xf32>
    %c0_9 = arith.constant 0 : index
    %c4 = arith.constant 4 : index
    %29 = vector.load %arg2[%c0_9, %c4] : memref<8x12xf32, #tpu.memory_space<vmem>>, vector<8x1xf32>
    %30 = vector.extract_strided_slice %1 {offsets = [0, 2], sizes = [1, 20], strides = [1, 1]} : vector<4x24xf32> to vector<1x20xf32>
    %31 = vector.broadcast %29 : vector<8x1xf32> to vector<8x20xf32>
    %32 = vector.broadcast %30 : vector<1x20xf32> to vector<8x20xf32>
    %33 = arith.mulf %31, %32 : vector<8x20xf32>
    %34 = arith.addf %28, %33 : vector<8x20xf32>
    %c0_10 = arith.constant 0 : index
    %c5 = arith.constant 5 : index
    %35 = vector.load %arg2[%c0_10, %c5] : memref<8x12xf32, #tpu.memory_space<vmem>>, vector<8x1xf32>
    %36 = vector.extract_strided_slice %1 {offsets = [1, 2], sizes = [1, 20], strides = [1, 1]} : vector<4x24xf32> to vector<1x20xf32>
    %37 = vector.broadcast %35 : vector<8x1xf32> to vector<8x20xf32>
    %38 = vector.broadcast %36 : vector<1x20xf32> to vector<8x20xf32>
    %39 = arith.mulf %37, %38 : vector<8x20xf32>
    %40 = arith.addf %34, %39 : vector<8x20xf32>
    %c0_11 = arith.constant 0 : index
    %c6 = arith.constant 6 : index
    %41 = vector.load %arg2[%c0_11, %c6] : memref<8x12xf32, #tpu.memory_space<vmem>>, vector<8x1xf32>
    %42 = vector.extract_strided_slice %1 {offsets = [2, 2], sizes = [1, 20], strides = [1, 1]} : vector<4x24xf32> to vector<1x20xf32>
    %43 = vector.broadcast %41 : vector<8x1xf32> to vector<8x20xf32>
    %44 = vector.broadcast %42 : vector<1x20xf32> to vector<8x20xf32>
    %45 = arith.mulf %43, %44 : vector<8x20xf32>
    %46 = arith.addf %40, %45 : vector<8x20xf32>
    %c0_12 = arith.constant 0 : index
    %c7 = arith.constant 7 : index
    %47 = vector.load %arg2[%c0_12, %c7] : memref<8x12xf32, #tpu.memory_space<vmem>>, vector<8x1xf32>
    %48 = vector.extract_strided_slice %1 {offsets = [3, 2], sizes = [1, 20], strides = [1, 1]} : vector<4x24xf32> to vector<1x20xf32>
    %49 = vector.broadcast %47 : vector<8x1xf32> to vector<8x20xf32>
    %50 = vector.broadcast %48 : vector<1x20xf32> to vector<8x20xf32>
    %51 = arith.mulf %49, %50 : vector<8x20xf32>
    %52 = arith.addf %46, %51 : vector<8x20xf32>
    %c0_13 = arith.constant 0 : index
    %c8 = arith.constant 8 : index
    %53 = vector.load %arg2[%c0_13, %c8] : memref<8x12xf32, #tpu.memory_space<vmem>>, vector<8x1xf32>
    %54 = vector.extract_strided_slice %1 {offsets = [0, 4], sizes = [1, 20], strides = [1, 1]} : vector<4x24xf32> to vector<1x20xf32>
    %55 = vector.broadcast %53 : vector<8x1xf32> to vector<8x20xf32>
    %56 = vector.broadcast %54 : vector<1x20xf32> to vector<8x20xf32>
    %57 = arith.mulf %55, %56 : vector<8x20xf32>
    %58 = arith.addf %52, %57 : vector<8x20xf32>
    %c0_14 = arith.constant 0 : index
    %c9 = arith.constant 9 : index
    %59 = vector.load %arg2[%c0_14, %c9] : memref<8x12xf32, #tpu.memory_space<vmem>>, vector<8x1xf32>
    %60 = vector.extract_strided_slice %1 {offsets = [1, 4], sizes = [1, 20], strides = [1, 1]} : vector<4x24xf32> to vector<1x20xf32>
    %61 = vector.broadcast %59 : vector<8x1xf32> to vector<8x20xf32>
    %62 = vector.broadcast %60 : vector<1x20xf32> to vector<8x20xf32>
    %63 = arith.mulf %61, %62 : vector<8x20xf32>
    %64 = arith.addf %58, %63 : vector<8x20xf32>
    %c0_15 = arith.constant 0 : index
    %c10 = arith.constant 10 : index
    %65 = vector.load %arg2[%c0_15, %c10] : memref<8x12xf32, #tpu.memory_space<vmem>>, vector<8x1xf32>
    %66 = vector.extract_strided_slice %1 {offsets = [2, 4], sizes = [1, 20], strides = [1, 1]} : vector<4x24xf32> to vector<1x20xf32>
    %67 = vector.broadcast %65 : vector<8x1xf32> to vector<8x20xf32>
    %68 = vector.broadcast %66 : vector<1x20xf32> to vector<8x20xf32>
    %69 = arith.mulf %67, %68 : vector<8x20xf32>
    %70 = arith.addf %64, %69 : vector<8x20xf32>
    %c0_16 = arith.constant 0 : index
    %c11 = arith.constant 11 : index
    %71 = vector.load %arg2[%c0_16, %c11] : memref<8x12xf32, #tpu.memory_space<vmem>>, vector<8x1xf32>
    %72 = vector.extract_strided_slice %1 {offsets = [3, 4], sizes = [1, 20], strides = [1, 1]} : vector<4x24xf32> to vector<1x20xf32>
    %73 = vector.broadcast %71 : vector<8x1xf32> to vector<8x20xf32>
    %74 = vector.broadcast %72 : vector<1x20xf32> to vector<8x20xf32>
    %75 = arith.mulf %73, %74 : vector<8x20xf32>
    %76 = arith.addf %70, %75 : vector<8x20xf32>
    %77 = tpu.iota {dimensions = array<i32: 1>} : vector<1x20xi32>
    %c2_i32 = arith.constant 2 : i32
    %78 = vector.broadcast %c2_i32 : i32 to vector<1x20xi32>
    %79 = arith.cmpi sge, %77, %78 : vector<1x20xi32>
    %c18_i32 = arith.constant 18 : i32
    %80 = vector.broadcast %c18_i32 : i32 to vector<1x20xi32>
    %81 = arith.cmpi slt, %77, %80 : vector<1x20xi32>
    %82 = arith.andi %79, %81 : vector<1x20xi1>
    %cst = arith.constant 0.000000e+00 : f32
    %83 = vector.broadcast %cst : f32 to vector<8x20xf32>
    %84 = arith.maximumf %76, %83 : vector<8x20xf32>
    %cst_17 = arith.constant 0.000000e+00 : f32
    %85 = vector.shape_cast %82 : vector<1x20xi1> to vector<1x20xi1>
    %86 = vector.broadcast %85 : vector<1x20xi1> to vector<8x20xi1>
    %87 = vector.broadcast %cst_17 : f32 to vector<8x20xf32>
    %88 = arith.select %86, %84, %87 : vector<8x20xi1>, vector<8x20xf32>
    %cst_18 = arith.constant 0.000000e+00 : f32
    %89 = vector.broadcast %cst_18 : f32 to vector<8x16xf32>
    %c0_19 = arith.constant 0 : index
    %c0_20 = arith.constant 0 : index
    %90 = vector.load %arg4[%c0_19, %c0_20] : memref<8x3xf32, #tpu.memory_space<vmem>>, vector<8x1xf32>
    %91 = vector.extract_strided_slice %88 {offsets = [0, 0], sizes = [8, 16], strides = [1, 1]} : vector<8x20xf32> to vector<8x16xf32>
    %92 = vector.broadcast %90 : vector<8x1xf32> to vector<8x16xf32>
    %93 = arith.mulf %92, %91 : vector<8x16xf32>
    %94 = arith.addf %89, %93 : vector<8x16xf32>
    %c0_21 = arith.constant 0 : index
    %c1_22 = arith.constant 1 : index
    %95 = vector.load %arg4[%c0_21, %c1_22] : memref<8x3xf32, #tpu.memory_space<vmem>>, vector<8x1xf32>
    %96 = vector.extract_strided_slice %88 {offsets = [0, 2], sizes = [8, 16], strides = [1, 1]} : vector<8x20xf32> to vector<8x16xf32>
    %97 = vector.broadcast %95 : vector<8x1xf32> to vector<8x16xf32>
    %98 = arith.mulf %97, %96 : vector<8x16xf32>
    %99 = arith.addf %94, %98 : vector<8x16xf32>
    %c0_23 = arith.constant 0 : index
    %c2_24 = arith.constant 2 : index
    %100 = vector.load %arg4[%c0_23, %c2_24] : memref<8x3xf32, #tpu.memory_space<vmem>>, vector<8x1xf32>
    %101 = vector.extract_strided_slice %88 {offsets = [0, 4], sizes = [8, 16], strides = [1, 1]} : vector<8x20xf32> to vector<8x16xf32>
    %102 = vector.broadcast %100 : vector<8x1xf32> to vector<8x16xf32>
    %103 = arith.mulf %102, %101 : vector<8x16xf32>
    %104 = arith.addf %99, %103 : vector<8x16xf32>
    %cst_25 = arith.constant dense<0.000000e+00> : vector<16xf32>
    %105 = vector.multi_reduction <add>, %104, %cst_25 [0] : vector<8x16xf32> to vector<16xf32>
    %106 = vector.shape_cast %105 : vector<16xf32> to vector<1x16xf32>
    %c0_26 = arith.constant 0 : index
    %107 = memref.load %arg5[%c0_26] : memref<1xf32, #tpu.memory_space<smem>>
    %108 = vector.broadcast %107 : f32 to vector<1x16xf32>
    %109 = arith.addf %106, %108 : vector<1x16xf32>
    %c0_27 = arith.constant 0 : index
    %c0_28 = arith.constant 0 : index
    %110 = vector.load %arg7[%c0_27, %c0_28] : memref<8x1xf32, #tpu.memory_space<vmem>>, vector<8x1xf32>
    %111 = vector.shape_cast %110 : vector<8x1xf32> to vector<8x1xf32>
    %112 = vector.broadcast %111 : vector<8x1xf32> to vector<8x16xf32>
    %c0_29 = arith.constant 0 : index
    %c0_30 = arith.constant 0 : index
    %113 = vector.load %arg6[%c0_29, %c0_30] : memref<8x12xf32, #tpu.memory_space<vmem>>, vector<8x1xf32>
    %114 = vector.extract_strided_slice %1 {offsets = [0, 3], sizes = [1, 16], strides = [1, 1]} : vector<4x24xf32> to vector<1x16xf32>
    %115 = vector.broadcast %113 : vector<8x1xf32> to vector<8x16xf32>
    %116 = vector.broadcast %114 : vector<1x16xf32> to vector<8x16xf32>
    %117 = arith.mulf %115, %116 : vector<8x16xf32>
    %118 = arith.addf %112, %117 : vector<8x16xf32>
    %c0_31 = arith.constant 0 : index
    %c1_32 = arith.constant 1 : index
    %119 = vector.load %arg6[%c0_31, %c1_32] : memref<8x12xf32, #tpu.memory_space<vmem>>, vector<8x1xf32>
    %120 = vector.extract_strided_slice %1 {offsets = [1, 3], sizes = [1, 16], strides = [1, 1]} : vector<4x24xf32> to vector<1x16xf32>
    %121 = vector.broadcast %119 : vector<8x1xf32> to vector<8x16xf32>
    %122 = vector.broadcast %120 : vector<1x16xf32> to vector<8x16xf32>
    %123 = arith.mulf %121, %122 : vector<8x16xf32>
    %124 = arith.addf %118, %123 : vector<8x16xf32>
    %c0_33 = arith.constant 0 : index
    %c2_34 = arith.constant 2 : index
    %125 = vector.load %arg6[%c0_33, %c2_34] : memref<8x12xf32, #tpu.memory_space<vmem>>, vector<8x1xf32>
    %126 = vector.extract_strided_slice %1 {offsets = [2, 3], sizes = [1, 16], strides = [1, 1]} : vector<4x24xf32> to vector<1x16xf32>
    %127 = vector.broadcast %125 : vector<8x1xf32> to vector<8x16xf32>
    %128 = vector.broadcast %126 : vector<1x16xf32> to vector<8x16xf32>
    %129 = arith.mulf %127, %128 : vector<8x16xf32>
    %130 = arith.addf %124, %129 : vector<8x16xf32>
    %c0_35 = arith.constant 0 : index
    %c3_36 = arith.constant 3 : index
    %131 = vector.load %arg6[%c0_35, %c3_36] : memref<8x12xf32, #tpu.memory_space<vmem>>, vector<8x1xf32>
    %132 = vector.extract_strided_slice %1 {offsets = [3, 3], sizes = [1, 16], strides = [1, 1]} : vector<4x24xf32> to vector<1x16xf32>
    %133 = vector.broadcast %131 : vector<8x1xf32> to vector<8x16xf32>
    %134 = vector.broadcast %132 : vector<1x16xf32> to vector<8x16xf32>
    %135 = arith.mulf %133, %134 : vector<8x16xf32>
    %136 = arith.addf %130, %135 : vector<8x16xf32>
    %c0_37 = arith.constant 0 : index
    %c4_38 = arith.constant 4 : index
    %137 = vector.load %arg6[%c0_37, %c4_38] : memref<8x12xf32, #tpu.memory_space<vmem>>, vector<8x1xf32>
    %138 = vector.extract_strided_slice %1 {offsets = [0, 4], sizes = [1, 16], strides = [1, 1]} : vector<4x24xf32> to vector<1x16xf32>
    %139 = vector.broadcast %137 : vector<8x1xf32> to vector<8x16xf32>
    %140 = vector.broadcast %138 : vector<1x16xf32> to vector<8x16xf32>
    %141 = arith.mulf %139, %140 : vector<8x16xf32>
    %142 = arith.addf %136, %141 : vector<8x16xf32>
    %c0_39 = arith.constant 0 : index
    %c5_40 = arith.constant 5 : index
    %143 = vector.load %arg6[%c0_39, %c5_40] : memref<8x12xf32, #tpu.memory_space<vmem>>, vector<8x1xf32>
    %144 = vector.extract_strided_slice %1 {offsets = [1, 4], sizes = [1, 16], strides = [1, 1]} : vector<4x24xf32> to vector<1x16xf32>
    %145 = vector.broadcast %143 : vector<8x1xf32> to vector<8x16xf32>
    %146 = vector.broadcast %144 : vector<1x16xf32> to vector<8x16xf32>
    %147 = arith.mulf %145, %146 : vector<8x16xf32>
    %148 = arith.addf %142, %147 : vector<8x16xf32>
    %c0_41 = arith.constant 0 : index
    %c6_42 = arith.constant 6 : index
    %149 = vector.load %arg6[%c0_41, %c6_42] : memref<8x12xf32, #tpu.memory_space<vmem>>, vector<8x1xf32>
    %150 = vector.extract_strided_slice %1 {offsets = [2, 4], sizes = [1, 16], strides = [1, 1]} : vector<4x24xf32> to vector<1x16xf32>
    %151 = vector.broadcast %149 : vector<8x1xf32> to vector<8x16xf32>
    %152 = vector.broadcast %150 : vector<1x16xf32> to vector<8x16xf32>
    %153 = arith.mulf %151, %152 : vector<8x16xf32>
    %154 = arith.addf %148, %153 : vector<8x16xf32>
    %c0_43 = arith.constant 0 : index
    %c7_44 = arith.constant 7 : index
    %155 = vector.load %arg6[%c0_43, %c7_44] : memref<8x12xf32, #tpu.memory_space<vmem>>, vector<8x1xf32>
    %156 = vector.extract_strided_slice %1 {offsets = [3, 4], sizes = [1, 16], strides = [1, 1]} : vector<4x24xf32> to vector<1x16xf32>
    %157 = vector.broadcast %155 : vector<8x1xf32> to vector<8x16xf32>
    %158 = vector.broadcast %156 : vector<1x16xf32> to vector<8x16xf32>
    %159 = arith.mulf %157, %158 : vector<8x16xf32>
    %160 = arith.addf %154, %159 : vector<8x16xf32>
    %c0_45 = arith.constant 0 : index
    %c8_46 = arith.constant 8 : index
    %161 = vector.load %arg6[%c0_45, %c8_46] : memref<8x12xf32, #tpu.memory_space<vmem>>, vector<8x1xf32>
    %162 = vector.extract_strided_slice %1 {offsets = [0, 5], sizes = [1, 16], strides = [1, 1]} : vector<4x24xf32> to vector<1x16xf32>
    %163 = vector.broadcast %161 : vector<8x1xf32> to vector<8x16xf32>
    %164 = vector.broadcast %162 : vector<1x16xf32> to vector<8x16xf32>
    %165 = arith.mulf %163, %164 : vector<8x16xf32>
    %166 = arith.addf %160, %165 : vector<8x16xf32>
    %c0_47 = arith.constant 0 : index
    %c9_48 = arith.constant 9 : index
    %167 = vector.load %arg6[%c0_47, %c9_48] : memref<8x12xf32, #tpu.memory_space<vmem>>, vector<8x1xf32>
    %168 = vector.extract_strided_slice %1 {offsets = [1, 5], sizes = [1, 16], strides = [1, 1]} : vector<4x24xf32> to vector<1x16xf32>
    %169 = vector.broadcast %167 : vector<8x1xf32> to vector<8x16xf32>
    %170 = vector.broadcast %168 : vector<1x16xf32> to vector<8x16xf32>
    %171 = arith.mulf %169, %170 : vector<8x16xf32>
    %172 = arith.addf %166, %171 : vector<8x16xf32>
    %c0_49 = arith.constant 0 : index
    %c10_50 = arith.constant 10 : index
    %173 = vector.load %arg6[%c0_49, %c10_50] : memref<8x12xf32, #tpu.memory_space<vmem>>, vector<8x1xf32>
    %174 = vector.extract_strided_slice %1 {offsets = [2, 5], sizes = [1, 16], strides = [1, 1]} : vector<4x24xf32> to vector<1x16xf32>
    %175 = vector.broadcast %173 : vector<8x1xf32> to vector<8x16xf32>
    %176 = vector.broadcast %174 : vector<1x16xf32> to vector<8x16xf32>
    %177 = arith.mulf %175, %176 : vector<8x16xf32>
    %178 = arith.addf %172, %177 : vector<8x16xf32>
    %c0_51 = arith.constant 0 : index
    %c11_52 = arith.constant 11 : index
    %179 = vector.load %arg6[%c0_51, %c11_52] : memref<8x12xf32, #tpu.memory_space<vmem>>, vector<8x1xf32>
    %180 = vector.extract_strided_slice %1 {offsets = [3, 5], sizes = [1, 16], strides = [1, 1]} : vector<4x24xf32> to vector<1x16xf32>
    %181 = vector.broadcast %179 : vector<8x1xf32> to vector<8x16xf32>
    %182 = vector.broadcast %180 : vector<1x16xf32> to vector<8x16xf32>
    %183 = arith.mulf %181, %182 : vector<8x16xf32>
    %184 = arith.addf %178, %183 : vector<8x16xf32>
    %185 = vector.broadcast %109 : vector<1x16xf32> to vector<8x16xf32>
    %186 = arith.addf %185, %184 : vector<8x16xf32>
    %cst_53 = arith.constant 0.000000e+00 : f32
    %187 = vector.broadcast %cst_53 : f32 to vector<8x16xf32>
    %188 = arith.maximumf %186, %187 : vector<8x16xf32>
    %c0_54 = arith.constant 0 : index
    %c0_55 = arith.constant 0 : index
    %c0_56 = arith.constant 0 : index
    %189 = vector.load %arg8[%c0_54, %c0_55, %c0_56] : memref<1x8x16xf32, #tpu.memory_space<vmem>>, vector<1x8x16xf32>
    %190 = vector.shape_cast %189 : vector<1x8x16xf32> to vector<8x16xf32>
    %191 = vector.shape_cast %188 : vector<8x16xf32> to vector<1x8x16xf32>
    tpu.vector_store %arg8[%c0_54, %c0_55, %c0_56], %191 {strides = array<i32>} : memref<1x8x16xf32, #tpu.memory_space<vmem>>, vector<1x8x16xf32>,
    return
  }
  func.func @transform_0(%arg0: i32) -> (i32, i32, i32) {
    %c0_i32 = arith.constant 0 : i32
    %c0_i32_0 = arith.constant 0 : i32
    %c0_i32_1 = arith.constant 0 : i32
    return %arg0, %c0_i32, %c0_i32_0 : i32, i32, i32
  }
  func.func @transform_1(%arg0: i32) -> (i32, i32) {
    %c0_i32 = arith.constant 0 : i32
    %c0_i32_0 = arith.constant 0 : i32
    %c0_i32_1 = arith.constant 0 : i32
    return %c0_i32, %c0_i32_0 : i32, i32
  }
  func.func @transform_2(%arg0: i32) -> (i32, i32) {
    %c0_i32 = arith.constant 0 : i32
    %c0_i32_0 = arith.constant 0 : i32
    %c0_i32_1 = arith.constant 0 : i32
    return %c0_i32, %c0_i32_0 : i32, i32
  }
  func.func @transform_3(%arg0: i32) -> (i32, i32) {
    %c0_i32 = arith.constant 0 : i32
    %c0_i32_0 = arith.constant 0 : i32
    %c0_i32_1 = arith.constant 0 : i32
    return %c0_i32, %c0_i32_0 : i32, i32
  }
  func.func @transform_4(%arg0: i32) -> i32 {
    %c0_i32 = arith.constant 0 : i32
    %c0_i32_0 = arith.constant 0 : i32
    return %c0_i32 : i32
  }
  func.func @transform_5(%arg0: i32) -> (i32, i32) {
    %c0_i32 = arith.constant 0 : i32
    %c0_i32_0 = arith.constant 0 : i32
    %c0_i32_1 = arith.constant 0 : i32
    return %c0_i32, %c0_i32_0 : i32, i32
  }
  func.func @transform_6(%arg0: i32) -> (i32, i32) {
    %c0_i32 = arith.constant 0 : i32
    %c0_i32_0 = arith.constant 0 : i32
    %c0_i32_1 = arith.constant 0 : i32
    return %c0_i32, %c0_i32_0 : i32, i32
  }
  func.func @transform_7(%arg0: i32) -> (i32, i32, i32) {
    %c0_i32 = arith.constant 0 : i32
    %c0_i32_0 = arith.constant 0 : i32
    %c0_i32_1 = arith.constant 0 : i32
    return %arg0, %c0_i32, %c0_i32_0 : i32, i32, i32
  }
}

</mosaic_0001>

<llo_original>
// kernel: tpu_custom_call.1
$region0: #{tpu_custom_call.1}
  #allocation0 [shape = 'u32[]', space=smem, size = 0x4, offset = 0x4, fixed_abs, tag = 'smem constant byte address 0x4 - core index']
  #allocation1 [shape = 'u32[144,128]{1,0:T(1,128)}', space=vmem, size = 0x12000, scoped, tag = 'internal scratch']
  #allocation2 [shape = 'f32[1]{0:T(128)S(6)}', space=smem, size = 0x200, scoped, tag = 'scoped memory for tpu_custom_call.1']
  %s0 = inlined_call_operand.vmem [shape: f32[2,4,24], index: 0, kind: input, shape index: {}]
  %s1 = inlined_call_operand.vmem [shape: f32[8,12], index: 1, kind: input, shape index: {}]
  %s2 = inlined_call_operand.vmem [shape: f32[8,1], index: 2, kind: input, shape index: {}]
  %s3 = inlined_call_operand.vmem [shape: f32[8,3], index: 3, kind: input, shape index: {}]
  %s4 = inlined_call_operand.<no memory space> [shape: f32[1], index: 4, kind: input, shape index: {}]
  %s5 = inlined_call_operand.vmem [shape: f32[8,12], index: 5, kind: input, shape index: {}]
  %s6 = inlined_call_operand.vmem [shape: f32[8,1], index: 6, kind: input, shape index: {}]
  %s7 = inlined_call_operand.hbm [shape: f32[2,8,16], index: 7, kind: output, shape index: {}]
  %s8 = sld [smem:[#allocation0]]
  $region61: #{tpu_custom_call.1} parent=0
    _
  %s10 = ssub.s32 1, %s8
  %s11 = scalar_select 0, %s10, %s8
  %12 = sst [smem:[#allocation2]] %s4
  $region1: #{tpu_custom_call.1} parent=0
    #allocation3 [shape = 'u8[8192]{0}', space=vmem, size = 0x2000, scoped, tag = 'output window, operand 0']
    #allocation4 [shape = 's32[2]{0}', space=sflag, size = 0x8, scoped, tag = 'scoped memory for tpu_custom_call.1']
    %13 = vsyncpa [#allocation4], 0
    %s14 = scalar_lea.sflag [#allocation4], 1
    %15 = vsyncpa %s14, 0
    loop: start=0, step=1, limit=4
    $region2: #{tpu_custom_call.1} parent=1 // loop_pre_header
      _
    $region3: #{tpu_custom_call.1} parent=1 // loop_header
      %s17 = sphi 0, %s21
      %p18 = scmp.ge.s32.totalorder %s17, 4
      %s27 = sphi 0, %s29
      %s30 = sphi 0, %s27
      %s31 = sphi 0, %s30
      %s47 = sphi 0, %s31
      %s51 = sphi 0, %s51
      %s53 = sphi 0, %s51
      %s54 = sphi 0, %s53
      %s68 = sphi 0, %s54
      %s72 = sphi 0, %s72
      %s74 = sphi 0, %s72
      %s75 = sphi 0, %s74
      %s89 = sphi 0, %s75
      %s93 = sphi 0, %s93
      %s95 = sphi 0, %s93
      %s96 = sphi 0, %s95
      %s110 = sphi 0, %s96
      %s114 = sphi 0, %s114
      %s116 = sphi 0, %s114
      %s117 = sphi 0, %s116
      %s131 = sphi 0, %s117
      %s135 = sphi 0, %s135
      %s137 = sphi 0, %s135
      %s138 = sphi 0, %s137
      %s152 = sphi 0, %s138
      %s156 = sphi 0, %s156
      %s158 = sphi 0, %s156
      %s159 = sphi 0, %s158
      %s173 = sphi 0, %s159
      %s179 = sphi 0, %s181
      %s182 = sphi 0, %s179
      %s183 = sphi 0, %s182
      %s199 = sphi 0, %s183
    $region4: #{tpu_custom_call.1} parent=1 // loop_header_branch
      %20 = sbr.rel (%p18) target = $region8
    $region5: #{tpu_custom_call.1} parent=1 // loop_body
      %s22 = ssub.s32 %s17, 1
      %s23 = ssub.s32 %s17, 2
      %s24 = sadd.s32 %s17, 1
      %s25 = ssub.s32 %s17, %s24
      %p26 = scmp.eq.s32.totalorder %s25, 0
      %s28 = sadd.s32 %s27, 1
      %s29 = scalar_select %p26, %s27, %s28
      %p32 = pneg %p26
      %p33 = scmp.eq.s32.totalorder %s17, 1
      %p34 = por %p32, %p33
      %p35 = scmp.ne.s32.totalorder %s27, %s30
      %p36 = scmp.eq.s32.totalorder %s17, 0
      %p37 = por %p35, %p36
      %p38 = scmp.ne.s32.totalorder %s27, %s30
      %p39 = scmp.eq.s32.totalorder %s22, 1
      %p40 = por %p38, %p39
      %p41 = scmp.ne.s32.totalorder %s30, %s31
      %p42 = scmp.eq.s32.totalorder %s22, 0
      %p43 = por %p41, %p42
      %p44 = scmp.ne.s32.totalorder %s30, %s31
      %p45 = scmp.eq.s32.totalorder %s23, 1
      %p46 = por %p44, %p45
      %p48 = scmp.ne.s32.totalorder %s31, %s47
      %p49 = scmp.eq.s32.totalorder %s23, 0
      %p50 = por %p48, %p49
      %s52 = sadd.s32 %s51, 1
      %p55 = scmp.eq.s32.totalorder %s17, 1
      %p56 = scmp.ne.s32.totalorder %s51, %s53
      %p57 = scmp.eq.s32.totalorder %s17, 0
      %p58 = por %p56, %p57
      %p59 = scmp.ne.s32.totalorder %s51, %s53
      %p60 = scmp.eq.s32.totalorder %s22, 1
      %p61 = por %p59, %p60
      %p62 = scmp.ne.s32.totalorder %s53, %s54
      %p63 = scmp.eq.s32.totalorder %s22, 0
      %p64 = por %p62, %p63
      %p65 = scmp.ne.s32.totalorder %s53, %s54
      %p66 = scmp.eq.s32.totalorder %s23, 1
      %p67 = por %p65, %p66
      %p69 = scmp.ne.s32.totalorder %s54, %s68
      %p70 = scmp.eq.s32.totalorder %s23, 0
      %p71 = por %p69, %p70
      %s73 = sadd.s32 %s72, 1
      %p76 = scmp.eq.s32.totalorder %s17, 1
      %p77 = scmp.ne.s32.totalorder %s72, %s74
      %p78 = scmp.eq.s32.totalorder %s17, 0
      %p79 = por %p77, %p78
      %p80 = scmp.ne.s32.totalorder %s72, %s74
      %p81 = scmp.eq.s32.totalorder %s22, 1
      %p82 = por %p80, %p81
      %p83 = scmp.ne.s32.totalorder %s74, %s75
      %p84 = scmp.eq.s32.totalorder %s22, 0
      %p85 = por %p83, %p84
      %p86 = scmp.ne.s32.totalorder %s74, %s75
      %p87 = scmp.eq.s32.totalorder %s23, 1
      %p88 = por %p86, %p87
      %p90 = scmp.ne.s32.totalorder %s75, %s89
      %p91 = scmp.eq.s32.totalorder %s23, 0
      %p92 = por %p90, %p91
      %s94 = sadd.s32 %s93, 1
      %p97 = scmp.eq.s32.totalorder %s17, 1
      %p98 = scmp.ne.s32.totalorder %s93, %s95
      %p99 = scmp.eq.s32.totalorder %s17, 0
      %p100 = por %p98, %p99
      %p101 = scmp.ne.s32.totalorder %s93, %s95
      %p102 = scmp.eq.s32.totalorder %s22, 1
      %p103 = por %p101, %p102
      %p104 = scmp.ne.s32.totalorder %s95, %s96
      %p105 = scmp.eq.s32.totalorder %s22, 0
      %p106 = por %p104, %p105
      %p107 = scmp.ne.s32.totalorder %s95, %s96
      %p108 = scmp.eq.s32.totalorder %s23, 1
      %p109 = por %p107, %p108
      %p111 = scmp.ne.s32.totalorder %s96, %s110
      %p112 = scmp.eq.s32.totalorder %s23, 0
      %p113 = por %p111, %p112
      %s115 = sadd.s32 %s114, 1
      %p118 = scmp.eq.s32.totalorder %s17, 1
      %p119 = scmp.ne.s32.totalorder %s114, %s116
      %p120 = scmp.eq.s32.totalorder %s17, 0
      %p121 = por %p119, %p120
      %p122 = scmp.ne.s32.totalorder %s114, %s116
      %p123 = scmp.eq.s32.totalorder %s22, 1
      %p124 = por %p122, %p123
      %p125 = scmp.ne.s32.totalorder %s116, %s117
      %p126 = scmp.eq.s32.totalorder %s22, 0
      %p127 = por %p125, %p126
      %p128 = scmp.ne.s32.totalorder %s116, %s117
      %p129 = scmp.eq.s32.totalorder %s23, 1
      %p130 = por %p128, %p129
      %p132 = scmp.ne.s32.totalorder %s117, %s131
      %p133 = scmp.eq.s32.totalorder %s23, 0
      %p134 = por %p132, %p133
      %s136 = sadd.s32 %s135, 1
      %p139 = scmp.eq.s32.totalorder %s17, 1
      %p140 = scmp.ne.s32.totalorder %s135, %s137
      %p141 = scmp.eq.s32.totalorder %s17, 0
      %p142 = por %p140, %p141
      %p143 = scmp.ne.s32.totalorder %s135, %s137
      %p144 = scmp.eq.s32.totalorder %s22, 1
      %p145 = por %p143, %p144
      %p146 = scmp.ne.s32.totalorder %s137, %s138
      %p147 = scmp.eq.s32.totalorder %s22, 0
      %p148 = por %p146, %p147
      %p149 = scmp.ne.s32.totalorder %s137, %s138
      %p150 = scmp.eq.s32.totalorder %s23, 1
      %p151 = por %p149, %p150
      %p153 = scmp.ne.s32.totalorder %s138, %s152
      %p154 = scmp.eq.s32.totalorder %s23, 0
      %p155 = por %p153, %p154
      %s157 = sadd.s32 %s156, 1
      %p160 = scmp.eq.s32.totalorder %s17, 1
      %p161 = scmp.ne.s32.totalorder %s156, %s158
      %p162 = scmp.eq.s32.totalorder %s17, 0
      %p163 = por %p161, %p162
      %p164 = scmp.ne.s32.totalorder %s156, %s158
      %p165 = scmp.eq.s32.totalorder %s22, 1
      %p166 = por %p164, %p165
      %p167 = scmp.ne.s32.totalorder %s158, %s159
      %p168 = scmp.eq.s32.totalorder %s22, 0
      %p169 = por %p167, %p168
      %p170 = scmp.ne.s32.totalorder %s158, %s159
      %p171 = scmp.eq.s32.totalorder %s23, 1
      %p172 = por %p170, %p171
      %p174 = scmp.ne.s32.totalorder %s159, %s173
      %p175 = scmp.eq.s32.totalorder %s23, 0
      %p176 = por %p174, %p175
      %s177 = ssub.s32 %s17, %s24
      %p178 = scmp.eq.s32.totalorder %s177, 0
      %s180 = sadd.s32 %s179, 1
      %s181 = scalar_select %p178, %s179, %s180
      %p184 = pneg %p178
      %p185 = scmp.eq.s32.totalorder %s17, 1
      %p186 = por %p184, %p185
      %p187 = scmp.ne.s32.totalorder %s179, %s182
      %p188 = scmp.eq.s32.totalorder %s17, 0
      %p189 = por %p187, %p188
      %p190 = scmp.ne.s32.totalorder %s179, %s182
      %p191 = scmp.eq.s32.totalorder %s22, 1
      %p192 = por %p190, %p191
      %p193 = scmp.ne.s32.totalorder %s182, %s183
      %p194 = scmp.eq.s32.totalorder %s22, 0
      %p195 = por %p193, %p194
      %p196 = scmp.ne.s32.totalorder %s182, %s183
      %p197 = scmp.eq.s32.totalorder %s23, 1
      %p198 = por %p196, %p197
      %p200 = scmp.ne.s32.totalorder %s183, %s199
      %p201 = scmp.eq.s32.totalorder %s23, 0
      %p202 = por %p200, %p201
      %p203 = scmp.le.s32.totalorder 1, %s17
      %p204 = scmp.lt.s32.totalorder %s17, 3
      %p205 = pnand %p203, %p204
      %p206 = pneg %p205
      // Predicated region
      $region9: #{tpu_custom_call.1} parent=5 // pred_check
        _
      $region10: #{tpu_custom_call.1} parent=5 // pred_check_branch
        %208 = sbr.rel (%p205) target = $region12
      $region11: #{tpu_custom_call.1} parent=5 // pred_region
        %s209 = ssub.s32 %s17, 1
        // Predicated region
        $region13: #{tpu_custom_call.1} parent=11 // pred_check
          %p210 = pneg %p64
        $region14: #{tpu_custom_call.1} parent=11 // pred_check_branch
          %212 = sbr.rel (%p210) target = $region16
        $region15: #{tpu_custom_call.1} parent=11 // pred_region
          _
        $region16: #{tpu_custom_call.1} parent=11 // pred_fallthru
          _
        // Predicated region
        $region17: #{tpu_custom_call.1} parent=11 // pred_check
          %p213 = pneg %p85
        $region18: #{tpu_custom_call.1} parent=11 // pred_check_branch
          %215 = sbr.rel (%p213) target = $region20
        $region19: #{tpu_custom_call.1} parent=11 // pred_region
          _
        $region20: #{tpu_custom_call.1} parent=11 // pred_fallthru
          _
        // Predicated region
        $region21: #{tpu_custom_call.1} parent=11 // pred_check
          %p216 = pneg %p106
        $region22: #{tpu_custom_call.1} parent=11 // pred_check_branch
          %218 = sbr.rel (%p216) target = $region24
        $region23: #{tpu_custom_call.1} parent=11 // pred_region
          _
        $region24: #{tpu_custom_call.1} parent=11 // pred_fallthru
          _
        // Predicated region
        $region25: #{tpu_custom_call.1} parent=11 // pred_check
          %p219 = pneg %p127
        $region26: #{tpu_custom_call.1} parent=11 // pred_check_branch
          %221 = sbr.rel (%p219) target = $region28
        $region27: #{tpu_custom_call.1} parent=11 // pred_region
          _
        $region28: #{tpu_custom_call.1} parent=11 // pred_fallthru
          _
        // Predicated region
        $region29: #{tpu_custom_call.1} parent=11 // pred_check
          %p222 = pneg %p148
        $region30: #{tpu_custom_call.1} parent=11 // pred_check_branch
          %224 = sbr.rel (%p222) target = $region32
        $region31: #{tpu_custom_call.1} parent=11 // pred_region
          _
        $region32: #{tpu_custom_call.1} parent=11 // pred_fallthru
          _
        // Predicated region
        $region33: #{tpu_custom_call.1} parent=11 // pred_check
          %p225 = pneg %p169
        $region34: #{tpu_custom_call.1} parent=11 // pred_check_branch
          %227 = sbr.rel (%p225) target = $region36
        $region35: #{tpu_custom_call.1} parent=11 // pred_region
          _
        $region36: #{tpu_custom_call.1} parent=11 // pred_fallthru
          _
      $region12: #{tpu_custom_call.1} parent=5 // pred_fallthru
        _
      %p228 = scmp.lt.s32.totalorder %s17, 2
      // Predicated region
      $region37: #{tpu_custom_call.1} parent=5 // pred_check
        %p229 = pneg %p228
      $region38: #{tpu_custom_call.1} parent=5 // pred_check_branch
        %231 = sbr.rel (%p229) target = $region40
      $region39: #{tpu_custom_call.1} parent=5 // pred_region
        // Predicated region
        $region41: #{tpu_custom_call.1} parent=39 // pred_check
          %p232 = pneg %p37
        $region42: #{tpu_custom_call.1} parent=39 // pred_check_branch
          %234 = sbr.rel (%p232) target = $region44
        $region43: #{tpu_custom_call.1} parent=39 // pred_region
          %p235 = scmp.lt.s32.totalorder %s17, 1
          %s236 = scalar_select %p235, %s17, 1
          %s237 = smul.addr %s236, 4
          %s238 = scalar_lea.vmem %s0, %s237
        $region44: #{tpu_custom_call.1} parent=39 // pred_fallthru
          _
      $region40: #{tpu_custom_call.1} parent=5 // pred_fallthru
        _
      %p239 = scmp.le.s32.totalorder 1, %s17
      %p240 = scmp.lt.s32.totalorder %s17, 3
      %p241 = pnand %p239, %p240
      %p242 = pneg %p241
      // Predicated region
      $region45: #{tpu_custom_call.1} parent=5 // pred_check
        _
      $region46: #{tpu_custom_call.1} parent=5 // pred_check_branch
        %244 = sbr.rel (%p241) target = $region48
      $region47: #{tpu_custom_call.1} parent=5 // pred_region
        %s245 = ssub.s32 %s17, 1
        %p246 = scmp.lt.s32.totalorder %s22, 1
        %s247 = scalar_select %p246, %s22, 1
        %s248 = smul.addr %s247, 4
        %s249 = scalar_lea.vmem %s0, %s248
        %p250 = pneg %p43
        %p251 = pneg %p40
        %p252 = pneg %p64
        %p253 = pneg %p61
        %p254 = pneg %p85
        %p255 = pneg %p82
        %p256 = pneg %p106
        %p257 = pneg %p103
        %p258 = pneg %p127
        %p259 = pneg %p124
        %p260 = pneg %p148
        %p261 = pneg %p145
        %p262 = pneg %p169
        %p263 = pneg %p166
        %p264 = pneg %p195
        %p265 = pneg %p192
        %s266 = sand.u32 %s182, 1
        %s267 = scalar_lea.sflag [#allocation4], %s266
        %s268 = sand.u32 %s182, 1
        %s269 = smul.addr %s268, 8
        %s270 = scalar_lea.vmem [#allocation3], %s269
        %p271 = scmp.lt.s32.totalorder %s22, 1
        %s272 = scalar_select %p271, %s22, 1
        %s273 = smul.addr %s272, 4
        %s274 = scalar_lea.vmem %s0, %s273
        %v275 = vld [vmem:[%s274] sm:$0xf]
        %v276 = vld [vmem:[%s2] sm:$0xff]
        %278 = vset.pattern.permute.xlu0 0
        %279 = vperm.xlu0 %278, %v276
        %v280 = vpop.permute.xlu0 %279
        %v282 = vld [vmem:[%s1] sm:$0xff]
        %284 = vset.pattern.permute.xlu0 0
        %285 = vperm.xlu0 %284, %v282
        %v286 = vpop.permute.xlu0 %285
        %v288 = vlaneseq
        %v289 = vshrl.u32 %v288, 7
        %v290 = vsub.s32 0, %v289
        %v291 = vrot.slane %v275, %v290
        %v292 = vmul.f32 %v286, %v291
        %v293 = vadd.f32 %v280, %v292
        %294 = vset.pattern.permute.xlu0 1
        %295 = vperm.xlu0 %294, %v282
        %v296 = vpop.permute.xlu0 %295
        %v298 = vlaneseq
        %v299 = vshrl.u32 %v298, 7
        %v300 = vsub.s32 1, %v299
        %v301 = vrot.slane %v275, %v300
        %v302 = vmul.f32 %v296, %v301
        %v303 = vadd.f32 %v293, %v302
        %304 = vset.pattern.permute.xlu0 2
        %305 = vperm.xlu0 %304, %v282
        %v306 = vpop.permute.xlu0 %305
        %v308 = vlaneseq
        %v309 = vshrl.u32 %v308, 7
        %v310 = vsub.s32 2, %v309
        %v311 = vrot.slane %v275, %v310
        %v312 = vmul.f32 %v306, %v311
        %v313 = vadd.f32 %v303, %v312
        %314 = vset.pattern.permute.xlu0 3
        %315 = vperm.xlu0 %314, %v282
        %v316 = vpop.permute.xlu0 %315
        %v318 = vlaneseq
        %v319 = vshrl.u32 %v318, 7
        %v320 = vsub.s32 3, %v319
        %v321 = vrot.slane %v275, %v320
        %v322 = vmul.f32 %v316, %v321
        %v323 = vadd.f32 %v313, %v322
        %324 = vset.pattern.permute.xlu0 4
        %325 = vperm.xlu0 %324, %v282
        %v326 = vpop.permute.xlu0 %325
        %v328 = vmul.f32 %v326, %v291
        %330 = vrot.lane.b32.xlu0 %v328, 126
        %v331 = vpop.permute.xlu0 %330
        %v333 = vadd.f32 %v323, %v331
        %334 = vset.pattern.permute.xlu0 5
        %335 = vperm.xlu0 %334, %v282
        %v336 = vpop.permute.xlu0 %335
        %v338 = vmul.f32 %v336, %v301
        %340 = vrot.lane.b32.xlu0 %v338, 126
        %v341 = vpop.permute.xlu0 %340
        %v343 = vadd.f32 %v333, %v341
        %344 = vset.pattern.permute.xlu0 6
        %345 = vperm.xlu0 %344, %v282
        %v346 = vpop.permute.xlu0 %345
        %v348 = vmul.f32 %v346, %v311
        %350 = vrot.lane.b32.xlu0 %v348, 126
        %v351 = vpop.permute.xlu0 %350
        %v353 = vadd.f32 %v343, %v351
        %354 = vset.pattern.permute.xlu0 7
        %355 = vperm.xlu0 %354, %v282
        %v356 = vpop.permute.xlu0 %355
        %v358 = vmul.f32 %v356, %v321
        %360 = vrot.lane.b32.xlu0 %v358, 126
        %v361 = vpop.permute.xlu0 %360
        %v363 = vadd.f32 %v353, %v361
        %364 = vset.pattern.permute.xlu0 8
        %365 = vperm.xlu0 %364, %v282
        %v366 = vpop.permute.xlu0 %365
        %v368 = vmul.f32 %v366, %v291
        %370 = vrot.lane.b32.xlu0 %v368, 124
        %v371 = vpop.permute.xlu0 %370
        %v373 = vadd.f32 %v363, %v371
        %374 = vset.pattern.permute.xlu0 9
        %375 = vperm.xlu0 %374, %v282
        %v376 = vpop.permute.xlu0 %375
        %v378 = vmul.f32 %v376, %v301
        %380 = vrot.lane.b32.xlu0 %v378, 124
        %v381 = vpop.permute.xlu0 %380
        %v383 = vadd.f32 %v373, %v381
        %384 = vset.pattern.permute.xlu0 10
        %385 = vperm.xlu0 %384, %v282
        %v386 = vpop.permute.xlu0 %385
        %v388 = vmul.f32 %v386, %v311
        %390 = vrot.lane.b32.xlu0 %v388, 124
        %v391 = vpop.permute.xlu0 %390
        %v393 = vadd.f32 %v383, %v391
        %394 = vset.pattern.permute.xlu0 11
        %395 = vperm.xlu0 %394, %v282
        %v396 = vpop.permute.xlu0 %395
        %v398 = vmul.f32 %v396, %v321
        %400 = vrot.lane.b32.xlu0 %v398, 124
        %v401 = vpop.permute.xlu0 %400
        %v403 = vadd.f32 %v393, %v401
        %v404 = vlaneseq
        %v405 = vand.u32 %v404, 127
        %vm406 = vcmp.ge.s32.totalorder %v405, 2
        %vm407 = vcmp.lt.s32.totalorder %v405, 18
        %vm408 = vmand %vm406, %vm407
        %v409 = vmax.f32 %v403, 0.0
        %v410 = vsel %vm408, 1, 0
        %vm411 = vcmp.eq.s32.totalorder %v410, 1
        %v412 = vsel %vm411, %v409, 0.0
        %v413 = vld [vmem:[%s3] sm:$0xff]
        %415 = vset.pattern.permute.xlu0 0
        %416 = vperm.xlu0 %415, %v413
        %v417 = vpop.permute.xlu0 %416
        %v419 = vmul.f32 %v417, %v412
        %v420 = vadd.f32 %v419, 0.0
        %421 = vset.pattern.permute.xlu0 1
        %422 = vperm.xlu0 %421, %v413
        %v423 = vpop.permute.xlu0 %422
        %v425 = vmul.f32 %v423, %v412
        %427 = vrot.lane.b32.xlu0 %v425, 126
        %v428 = vpop.permute.xlu0 %427
        %v430 = vadd.f32 %v420, %v428
        %431 = vset.pattern.permute.xlu0 2
        %432 = vperm.xlu0 %431, %v413
        %v433 = vpop.permute.xlu0 %432
        %v435 = vmul.f32 %v433, %v412
        %437 = vrot.lane.b32.xlu0 %v435, 124
        %v438 = vpop.permute.xlu0 %437
        %v440 = vadd.f32 %v430, %v438
        %vm441 = vcmask 130048
        %v442 = vsel %vm441, %v440, 0.0
        %v443 = vrot.slane %v442, 4
        %v444 = vadd.f32 %v442, %v443
        %v445 = vrot.slane %v444, 2
        %v446 = vadd.f32 %v444, %v445
        %v447 = vrot.slane %v446, 1
        %v448 = vadd.f32 %v446, %v447
        %s449 = sld [smem:[#allocation2]]
        %v450 = vstv %s449
        %v451 = vadd.f32 %v448, %v450
        %v452 = vld [vmem:[%s6] sm:$0xff]
        %454 = vset.pattern.permute.xlu0 0
        %455 = vperm.xlu0 %454, %v452
        %v456 = vpop.permute.xlu0 %455
        %v458 = vld [vmem:[%s5] sm:$0xff]
        %460 = vset.pattern.permute.xlu0 0
        %461 = vperm.xlu0 %460, %v458
        %v462 = vpop.permute.xlu0 %461
        %v464 = vmul.f32 %v462, %v291
        %v465 = vadd.f32 %v456, %v464
        %466 = vset.pattern.permute.xlu0 1
        %467 = vperm.xlu0 %466, %v458
        %v468 = vpop.permute.xlu0 %467
        %v470 = vmul.f32 %v468, %v301
        %v471 = vadd.f32 %v465, %v470
        %472 = vset.pattern.permute.xlu0 2
        %473 = vperm.xlu0 %472, %v458
        %v474 = vpop.permute.xlu0 %473
        %v476 = vmul.f32 %v474, %v311
        %v477 = vadd.f32 %v471, %v476
        %478 = vset.pattern.permute.xlu0 3
        %479 = vperm.xlu0 %478, %v458
        %v480 = vpop.permute.xlu0 %479
        %v482 = vmul.f32 %v480, %v321
        %v483 = vadd.f32 %v477, %v482
        %484 = vset.pattern.permute.xlu0 4
        %485 = vperm.xlu0 %484, %v458
        %v486 = vpop.permute.xlu0 %485
        %v488 = vmul.f32 %v486, %v291
        %490 = vrot.lane.b32.xlu0 %v488, 127
        %v491 = vpop.permute.xlu0 %490
        %v493 = vadd.f32 %v483, %v491
        %494 = vset.pattern.permute.xlu0 5
        %495 = vperm.xlu0 %494, %v458
        %v496 = vpop.permute.xlu0 %495
        %v498 = vmul.f32 %v496, %v301
        %500 = vrot.lane.b32.xlu0 %v498, 127
        %v501 = vpop.permute.xlu0 %500
        %v503 = vadd.f32 %v493, %v501
        %504 = vset.pattern.permute.xlu0 6
        %505 = vperm.xlu0 %504, %v458
        %v506 = vpop.permute.xlu0 %505
        %v508 = vmul.f32 %v506, %v311
        %510 = vrot.lane.b32.xlu0 %v508, 127
        %v511 = vpop.permute.xlu0 %510
        %v513 = vadd.f32 %v503, %v511
        %514 = vset.pattern.permute.xlu0 7
        %515 = vperm.xlu0 %514, %v458
        %v516 = vpop.permute.xlu0 %515
        %v518 = vmul.f32 %v516, %v321
        %520 = vrot.lane.b32.xlu0 %v518, 127
        %v521 = vpop.permute.xlu0 %520
        %v523 = vadd.f32 %v513, %v521
        %524 = vset.pattern.permute.xlu0 8
        %525 = vperm.xlu0 %524, %v458
        %v526 = vpop.permute.xlu0 %525
        %v528 = vmul.f32 %v526, %v291
        %530 = vrot.lane.b32.xlu0 %v528, 126
        %v531 = vpop.permute.xlu0 %530
        %v533 = vadd.f32 %v523, %v531
        %534 = vset.pattern.permute.xlu0 9
        %535 = vperm.xlu0 %534, %v458
        %v536 = vpop.permute.xlu0 %535
        %v538 = vmul.f32 %v536, %v301
        %540 = vrot.lane.b32.xlu0 %v538, 126
        %v541 = vpop.permute.xlu0 %540
        %v543 = vadd.f32 %v533, %v541
        %544 = vset.pattern.permute.xlu0 10
        %545 = vperm.xlu0 %544, %v458
        %v546 = vpop.permute.xlu0 %545
        %v548 = vmul.f32 %v546, %v311
        %550 = vrot.lane.b32.xlu0 %v548, 126
        %v551 = vpop.permute.xlu0 %550
        %v553 = vadd.f32 %v543, %v551
        %554 = vset.pattern.permute.xlu0 11
        %555 = vperm.xlu0 %554, %v458
        %v556 = vpop.permute.xlu0 %555
        %v558 = vmul.f32 %v556, %v321
        %560 = vrot.lane.b32.xlu0 %v558, 126
        %v561 = vpop.permute.xlu0 %560
        %v563 = vadd.f32 %v553, %v561
        %565 = vrot.lane.b32.xlu0 %v563, 125
        %v566 = vpop.permute.xlu0 %565
        %v568 = vadd.f32 %v451, %v566
        %v569 = vmax.f32 %v568, 0.0
        %570 = vst.msk [vmem:[%s270] sm:$0xff] %vm441, %v569
        %s571 = sand.u32 %s182, 1
        %s572 = scalar_lea.sflag [#allocation4], %s571
        %s573 = sand.u32 %s182, 1
        %s574 = smul.addr %s573, 8
        %s575 = scalar_lea.vmem [#allocation3], %s574
        // Predicated region
        $region49: #{tpu_custom_call.1} parent=47 // pred_check
          %p576 = pneg %p192
        $region50: #{tpu_custom_call.1} parent=47 // pred_check_branch
          %578 = sbr.rel (%p576) target = $region52
        $region51: #{tpu_custom_call.1} parent=47 // pred_region
          %s580 = ssub.s32 128, 128
          %581 = vsyncadd %s572, %s580
          %s582 = smul.addr %s22, 128
          %s583 = scalar_lea.hbm %s7, %s582
          %s585 = sshll.u32 %s575, 4
          %s586 = int_to_ptr.vmem [resolvable:$true] %s585
          %588 = dma.vmem_to_hbm [thread:$0]  %s586, 128, %s583, %s572
        $region52: #{tpu_custom_call.1} parent=47 // pred_fallthru
          _
      $region48: #{tpu_custom_call.1} parent=5 // pred_fallthru
        _
      %p589 = scmp.le.s32.totalorder 2, %s17
      // Predicated region
      $region53: #{tpu_custom_call.1} parent=5 // pred_check
        %p590 = pneg %p589
      $region54: #{tpu_custom_call.1} parent=5 // pred_check_branch
        %592 = sbr.rel (%p590) target = $region56
      $region55: #{tpu_custom_call.1} parent=5 // pred_region
        %s593 = ssub.s32 %s17, 2
        // Predicated region
        $region57: #{tpu_custom_call.1} parent=55 // pred_check
          %p594 = pneg %p198
        $region58: #{tpu_custom_call.1} parent=55 // pred_check_branch
          %596 = sbr.rel (%p594) target = $region60
        $region59: #{tpu_custom_call.1} parent=55 // pred_region
          %s597 = sand.u32 %s183, 1
          %s598 = scalar_lea.sflag [#allocation4], %s597
          %s599 = sand.u32 %s183, 1
          %s600 = smul.addr %s599, 8
          %s601 = scalar_lea.vmem [#allocation3], %s600
          %602 = dma.done %s598, 128
        $region60: #{tpu_custom_call.1} parent=55 // pred_fallthru
          _
      $region56: #{tpu_custom_call.1} parent=5 // pred_fallthru
        _
    $region6: #{tpu_custom_call.1} parent=1 // loop_footer
      %s21 = sadd.s32 1, %s17
    $region7: #{tpu_custom_call.1} parent=1 // loop_footer_branch
      %16 = sbr.rel target = $region3
    $region8: #{tpu_custom_call.1} parent=1 // loop_exit
      _
    %603 = vsyncpa [#allocation4], 1
    %s604 = scalar_lea.sflag [#allocation4], 1
    %605 = vsyncpa %s604, 1

</llo_original>
